<compile_context>
chip_gen: v5e
topology: v5e:2x2
jax: 0.10.0
libtpu: 0.0.40
codegen_flags: <defaults>
</compile_context>

<pallas_src>
import functools
import math

import jax
import jax.numpy as jnp
from jax import lax
from jax.experimental import pallas as pl
from jax.experimental.pallas import tpu as pltpu


def _round_up(x, m):
    return ((x + m - 1) // m) * m


def _gat_kernel(h_ref, w_ref, a1_ref, a2_ref, adj_ref,
                hp_ref, att_ref,
                wh_scr, wh1_scr, wh2_scr,
                *, n_real, alpha, concat, row_tile):
    i = pl.program_id(0)
    n_pad = att_ref.shape[1]

    # --- grid step 0: node projection + both attention projections, kept in
    # VMEM scratch for the whole call (no HBM round trip, no recompute).
    @pl.when(i == 0)
    def _():
        wh = jnp.dot(h_ref[...], w_ref[...],
                     preferred_element_type=jnp.float32)          # (Np, Fp)
        wh_scr[...] = wh
        # Wh1 = Wh @ a[:F]  -> per-node scalar kept as a column (Np, 1)
        wh1_scr[...] = jnp.sum(wh * a1_ref[0:1, :], axis=1, keepdims=True)
        # Wh2 = Wh @ a[F:]  -> per-node scalar kept lane-dense as a row:
        # contract the feature axis of a2 (8, Fp) with Wh (Np, Fp) -> (8, Np)
        wh2_scr[...] = lax.dot_general(
            a2_ref[...], wh,
            dimension_numbers=(((1,), (1,)), ((), ())),
            preferred_element_type=jnp.float32)

    row0 = pl.multiple_of(i * row_tile, row_tile)
    wh1_tile = wh1_scr[pl.ds(row0, row_tile), :]                  # (TN, 1)
    wh2_row = wh2_scr[0:1, :]                                     # (1, Np)

    # e = LeakyReLU(Wh1 + Wh2^T)
    e = wh1_tile + wh2_row                                        # (TN, Np)
    e = jnp.where(e > 0, e, jnp.float32(alpha) * e)

    # Adjacency mask exactly as in the PyTorch module ...
    logits = jnp.where(adj_ref[...] > 0, e, jnp.float32(-9.0e15))
    # ... and padded columns get something far below -9e15 so padding can
    # never win the softmax (keeps the all-zero-adj-row corner case exact).
    col = lax.broadcasted_iota(jnp.int32, (row_tile, n_pad), 1)
    logits = jnp.where(col < n_real, logits, jnp.float32(-1.0e30))

    m = jnp.max(logits, axis=1, keepdims=True)
    p = jnp.exp(logits - m)
    att = p / jnp.sum(p, axis=1, keepdims=True)
    # TODO(synk): attention dropout (training-mode only) omitted in eval.
    att_ref[...] = att

    hp = jnp.dot(att, wh_scr[...], preferred_element_type=jnp.float32)
    if concat:
        hp = jnp.where(hp > 0, hp, jnp.exp(hp) - 1.0)             # ELU(alpha=1)
    hp_ref[...] = hp


def gat_forward(h, adj, W, a, *, alpha, concat=True, row_tile=128):
    """Run the GAT layer forward pass with a single fused Pallas kernel."""
    N, f_in = h.shape
    f_out = W.shape[1]
    f32 = jnp.float32

    n_pad = _round_up(N, row_tile)          # lane-dense attention columns
    fin_pad = _round_up(f_in, 128)
    fout_pad = _round_up(f_out, 128)

    h_p = jnp.zeros((n_pad, fin_pad), f32).at[:N, :f_in].set(h.astype(f32))
    w_p = jnp.zeros((fin_pad, fout_pad), f32).at[:f_in, :f_out].set(W.astype(f32))
    a1 = jnp.zeros((8, fout_pad), f32).at[0, :f_out].set(a[:f_out, 0].astype(f32))
    a2 = jnp.zeros((8, fout_pad), f32).at[0, :f_out].set(a[f_out:, 0].astype(f32))
    adj_p = jnp.zeros((n_pad, n_pad), jnp.int32).at[:N, :N].set(adj.astype(jnp.int32))

    kernel = functools.partial(_gat_kernel, n_real=N, alpha=float(alpha),
                               concat=bool(concat), row_tile=row_tile)

    hp_pad, att_pad = pl.pallas_call(
        kernel,
        out_shape=(jax.ShapeDtypeStruct((n_pad, fout_pad), f32),
                   jax.ShapeDtypeStruct((n_pad, n_pad), f32)),
        grid_spec=pltpu.PrefetchScalarGridSpec(
            num_scalar_prefetch=0,
            grid=(n_pad // row_tile,),
            in_specs=[
                pl.BlockSpec((n_pad, fin_pad), lambda i: (0, 0)),     # h (resident)
                pl.BlockSpec((fin_pad, fout_pad), lambda i: (0, 0)),  # W (resident)
                pl.BlockSpec((8, fout_pad), lambda i: (0, 0)),        # a[:F]
                pl.BlockSpec((8, fout_pad), lambda i: (0, 0)),        # a[F:]
                pl.BlockSpec((row_tile, n_pad), lambda i: (i, 0)),    # adj row tile
            ],
            out_specs=(
                pl.BlockSpec((row_tile, fout_pad), lambda i: (i, 0)), # h_prime tile
                pl.BlockSpec((row_tile, n_pad), lambda i: (i, 0)),    # attention tile
            ),
            scratch_shapes=[
                pltpu.VMEM((n_pad, fout_pad), f32),   # Wh
                pltpu.VMEM((n_pad, 1), f32),          # Wh @ a[:F] (column)
                pltpu.VMEM((8, n_pad), f32),          # (Wh @ a[F:])^T (row 0)
            ],
        ),
        compiler_params=pltpu.CompilerParams(
            dimension_semantics=("arbitrary",)),  # tile 0 fills the scratches
    )(h_p, w_p, a1, a2, adj_p)

    return hp_pad[:N, :f_out], att_pad[:N, :N]


class GraphAttentionLayerPallas:
    """JAX/Pallas equivalent of the PyTorch GraphAttentionLayer (eval mode)."""

    def __init__(self, in_features, out_features, dropout, alpha,
                 concat=True, key=None):
        self.in_features = in_features
        self.out_features = out_features
        self.dropout = dropout            # eval mode: unused
        self.alpha = alpha
        self.concat = concat
        if key is None:
            key = jax.random.PRNGKey(0)
        kw, ka = jax.random.split(key)
        gain = 1.414                      # xavier_uniform_(gain=1.414)
        bw = gain * math.sqrt(6.0 / (in_features + out_features))
        self.W = jax.random.uniform(kw, (in_features, out_features),
                                    jnp.float32, -bw, bw)
        ba = gain * math.sqrt(6.0 / (2 * out_features + 1))
        self.a = jax.random.uniform(ka, (2 * out_features, 1),
                                    jnp.float32, -ba, ba)

    def __call__(self, h, adj):
        return gat_forward(h, adj, self.W, self.a,
                           alpha=self.alpha, concat=self.concat)


def _gat_reference(h, adj, W, a, *, alpha, concat):
    """Pure-JAX reference matching the PyTorch forward (eval mode)."""
    with jax.default_matmul_precision("highest"):
        f_out = W.shape[1]
        Wh = jnp.dot(h, W)
        Wh1 = jnp.dot(Wh, a[:f_out, :])
        Wh2 = jnp.dot(Wh, a[f_out:, :])
        e = Wh1 + Wh2.T
        e = jnp.where(e > 0, e, alpha * e)
        att = jnp.where(adj > 0, e, -9.0e15)
        att = jax.nn.softmax(att, axis=1)
        hp = jnp.dot(att, Wh)
        if concat:
            hp = jnp.where(hp > 0, hp, jnp.exp(hp) - 1.0)
        return hp, att


if __name__ == "__main__":
    # Small shapes consistent with the module's script: adj is 66x66 nodes.
    N, in_features, out_features = 66, 64, 32
    dropout, alpha = 0.1, 0.2

    root = jax.random.PRNGKey(0)
    k_adj, k_h, k_param = jax.random.split(root, 3)
    adj = jax.random.randint(k_adj, (N, N), 0, 2, dtype=jnp.int32)
    h = jax.random.normal(k_h, (N, in_features), jnp.float32)

    layer = GraphAttentionLayerPallas(in_features, out_features, dropout,
                                      alpha, concat=True, key=k_param)
    h_prime, attention = layer(h, adj)
    jax.block_until_ready((h_prime, attention))

    assert h_prime.shape == (N, out_features)
    assert attention.shape == (N, N)

    hp_ref, att_ref = _gat_reference(h, adj, layer.W, layer.a,
                                     alpha=alpha, concat=True)
    assert bool(jnp.allclose(attention, att_ref, atol=2e-3, rtol=2e-2))
    assert bool(jnp.allclose(h_prime, hp_ref, atol=2e-3, rtol=2e-2))

    print("KERNEL_OK")
</pallas_src>

<mosaic_0001>
module attributes {stable_mosaic.version = 11 : i64} {
  func.func @_gat_kernel(%arg0: i32, %arg1: memref<128x128xf32, #tpu.memory_space<vmem>>, %arg2: memref<128x128xf32, #tpu.memory_space<vmem>>, %arg3: memref<8x128xf32, #tpu.memory_space<vmem>>, %arg4: memref<8x128xf32, #tpu.memory_space<vmem>>, %arg5: memref<128x128xi32, #tpu.memory_space<vmem>>, %arg6: memref<128x128xf32, #tpu.memory_space<vmem>>, %arg7: memref<128x128xf32, #tpu.memory_space<vmem>>, %arg8: memref<128x128xf32, #tpu.memory_space<vmem>>, %arg9: memref<128x1xf32, #tpu.memory_space<vmem>>, %arg10: memref<8x128xf32, #tpu.memory_space<vmem>>) attributes {dimension_semantics = [#tpu.dimension_semantics<arbitrary>], iteration_bounds = array<i64: 1>, scalar_prefetch = 0 : i64, scratch_operands = 3 : i64, tpu.core_type = #tpu.core_type<tc>, window_params = [{pipeline_mode = #tpu.pipeline_mode<synchronous>, transform_indices = @transform_0, window_bounds = array<i64: 128, 128>}, {pipeline_mode = #tpu.pipeline_mode<synchronous>, transform_indices = @transform_1, window_bounds = array<i64: 128, 128>}, {pipeline_mode = #tpu.pipeline_mode<synchronous>, transform_indices = @transform_2, window_bounds = array<i64: 8, 128>}, {pipeline_mode = #tpu.pipeline_mode<synchronous>, transform_indices = @transform_3, window_bounds = array<i64: 8, 128>}, {transform_indices = @transform_4, window_bounds = array<i64: 128, 128>}, {transform_indices = @transform_5, window_bounds = array<i64: 128, 128>}, {transform_indices = @transform_6, window_bounds = array<i64: 128, 128>}]} {
    %c0_i32 = arith.constant 0 : i32
    %0 = arith.cmpi eq, %arg0, %c0_i32 : i32
    %1 = arith.extui %0 : i1 to i32
    %c0_i32_0 = arith.constant 0 : i32
    %2 = arith.cmpi ne, %1, %c0_i32_0 : i32
    scf.if %2 {
      %c0_20 = arith.constant 0 : index
      %c0_21 = arith.constant 0 : index
      %45 = vector.load %arg1[%c0_20, %c0_21] : memref<128x128xf32, #tpu.memory_space<vmem>>, vector<128x128xf32>
      %c0_22 = arith.constant 0 : index
      %c0_23 = arith.constant 0 : index
      %46 = vector.load %arg2[%c0_22, %c0_23] : memref<128x128xf32, #tpu.memory_space<vmem>>, vector<128x128xf32>
      %cst_24 = arith.constant dense<0.000000e+00> : vector<128x128xf32>
      %47 = tpu.matmul %45, %46, %cst_24 {dimension_numbers = #tpu.dot_dimension_numbers<[1], [0], [0], [1], [0, 0, 1, 1], [], []>} : vector<128x128xf32>, vector<128x128xf32>, vector<128x128xf32> -> vector<128x128xf32>
      %c0_25 = arith.constant 0 : index
      %c0_26 = arith.constant 0 : index
      %48 = vector.load %arg8[%c0_25, %c0_26] : memref<128x128xf32, #tpu.memory_space<vmem>>, vector<128x128xf32>
      tpu.vector_store %arg8[%c0_25, %c0_26], %47 {strides = array<i32>} : memref<128x128xf32, #tpu.memory_space<vmem>>, vector<128x128xf32>,
      %c0_27 = arith.constant 0 : index
      %c0_28 = arith.constant 0 : index
      %49 = vector.load %arg3[%c0_27, %c0_28] : memref<8x128xf32, #tpu.memory_space<vmem>>, vector<1x128xf32>
      %50 = vector.broadcast %49 : vector<1x128xf32> to vector<128x128xf32>
      %51 = arith.mulf %47, %50 : vector<128x128xf32>
      %cst_29 = arith.constant dense<0.000000e+00> : vector<128xf32>
      %52 = vector.multi_reduction <add>, %51, %cst_29 [1] : vector<128x128xf32> to vector<128xf32>
      %53 = vector.shape_cast %52 : vector<128xf32> to vector<128x1xf32>
      %c0_30 = arith.constant 0 : index
      %c0_31 = arith.constant 0 : index
      %54 = vector.load %arg9[%c0_30, %c0_31] : memref<128x1xf32, #tpu.memory_space<vmem>>, vector<128x1xf32>
      tpu.vector_store %arg9[%c0_30, %c0_31], %53 {strides = array<i32>} : memref<128x1xf32, #tpu.memory_space<vmem>>, vector<128x1xf32>,
      %c0_32 = arith.constant 0 : index
      %c0_33 = arith.constant 0 : index
      %55 = vector.load %arg4[%c0_32, %c0_33] : memref<8x128xf32, #tpu.memory_space<vmem>>, vector<8x128xf32>
      %cst_34 = arith.constant dense<0.000000e+00> : vector<8x128xf32>
      %56 = tpu.matmul %55, %47, %cst_34 {dimension_numbers = #tpu.dot_dimension_numbers<[1], [1], [0], [0], [0, 0, 1, 0], [], []>} : vector<8x128xf32>, vector<128x128xf32>, vector<8x128xf32> -> vector<8x128xf32>
      %c0_35 = arith.constant 0 : index
      %c0_36 = arith.constant 0 : index
      %57 = vector.load %arg10[%c0_35, %c0_36] : memref<8x128xf32, #tpu.memory_space<vmem>>, vector<8x128xf32>
      tpu.vector_store %arg10[%c0_35, %c0_36], %56 {strides = array<i32>} : memref<8x128xf32, #tpu.memory_space<vmem>>, vector<8x128xf32>,
    } else {
    }
    %c128_i32 = arith.constant 128 : i32
    %3 = arith.muli %arg0, %c128_i32 : i32
    %4 = tpu.assume_multiple %3, 128 : i32
    %5 = arith.index_cast %4 : i32 to index
    %c0 = arith.constant 0 : index
    %6 = vector.load %arg9[%5, %c0] : memref<128x1xf32, #tpu.memory_space<vmem>>, vector<128x1xf32>
    %c0_1 = arith.constant 0 : index
    %c0_2 = arith.constant 0 : index
    %7 = vector.load %arg10[%c0_1, %c0_2] : memref<8x128xf32, #tpu.memory_space<vmem>>, vector<1x128xf32>
    %8 = vector.broadcast %6 : vector<128x1xf32> to vector<128x128xf32>
    %9 = vector.broadcast %7 : vector<1x128xf32> to vector<128x128xf32>
    %10 = arith.addf %8, %9 : vector<128x128xf32>
    %cst = arith.constant 0.000000e+00 : f32
    %11 = vector.broadcast %cst : f32 to vector<128x128xf32>
    %12 = arith.cmpf ogt, %10, %11 : vector<128x128xf32>
    %cst_3 = arith.constant 2.000000e-01 : f32
    %13 = vector.broadcast %cst_3 : f32 to vector<128x128xf32>
    %14 = arith.mulf %13, %10 : vector<128x128xf32>
    %15 = arith.select %12, %10, %14 : vector<128x128xi1>, vector<128x128xf32>
    %c0_4 = arith.constant 0 : index
    %c0_5 = arith.constant 0 : index
    %16 = vector.load %arg5[%c0_4, %c0_5] : memref<128x128xi32, #tpu.memory_space<vmem>>, vector<128x128xi32>
    %c0_i32_6 = arith.constant 0 : i32
    %17 = vector.broadcast %c0_i32_6 : i32 to vector<128x128xi32>
    %18 = arith.cmpi sgt, %16, %17 : vector<128x128xi32>
    %cst_7 = arith.constant -9.000000e+15 : f32
    %19 = vector.broadcast %cst_7 : f32 to vector<128x128xf32>
    %20 = arith.select %18, %15, %19 : vector<128x128xi1>, vector<128x128xf32>
    %21 = tpu.iota {dimensions = array<i32: 1>} : vector<128x128xi32>
    %c66_i32 = arith.constant 66 : i32
    %22 = vector.broadcast %c66_i32 : i32 to vector<128x128xi32>
    %23 = arith.cmpi slt, %21, %22 : vector<128x128xi32>
    %cst_8 = arith.constant -1.000000e+30 : f32
    %24 = vector.broadcast %cst_8 : f32 to vector<128x128xf32>
    %25 = arith.select %23, %20, %24 : vector<128x128xi1>, vector<128x128xf32>
    %cst_9 = arith.constant dense<0xFF800000> : vector<128xf32>
    %26 = vector.multi_reduction <maximumf>, %25, %cst_9 [1] : vector<128x128xf32> to vector<128xf32>
    %27 = vector.shape_cast %26 : vector<128xf32> to vector<128x1xf32>
    %28 = vector.broadcast %27 : vector<128x1xf32> to vector<128x128xf32>
    %29 = arith.subf %25, %28 : vector<128x128xf32>
    %30 = math.exp %29 : vector<128x128xf32>
    %cst_10 = arith.constant dense<0.000000e+00> : vector<128xf32>
    %31 = vector.multi_reduction <add>, %30, %cst_10 [1] : vector<128x128xf32> to vector<128xf32>
    %32 = vector.shape_cast %31 : vector<128xf32> to vector<128x1xf32>
    %33 = vector.broadcast %32 : vector<128x1xf32> to vector<128x128xf32>
    %34 = arith.divf %30, %33 : vector<128x128xf32>
    %c0_11 = arith.constant 0 : index
    %c0_12 = arith.constant 0 : index
    %35 = vector.load %arg7[%c0_11, %c0_12] : memref<128x128xf32, #tpu.memory_space<vmem>>, vector<128x128xf32>
    tpu.vector_store %arg7[%c0_11, %c0_12], %34 {strides = array<i32>} : memref<128x128xf32, #tpu.memory_space<vmem>>, vector<128x128xf32>,
    %c0_13 = arith.constant 0 : index
    %c0_14 = arith.constant 0 : index
    %36 = vector.load %arg8[%c0_13, %c0_14] : memref<128x128xf32, #tpu.memory_space<vmem>>, vector<128x128xf32>
    %cst_15 = arith.constant dense<0.000000e+00> : vector<128x128xf32>
    %37 = tpu.matmul %34, %36, %cst_15 {dimension_numbers = #tpu.dot_dimension_numbers<[1], [0], [0], [1], [0, 0, 1, 1], [], []>} : vector<128x128xf32>, vector<128x128xf32>, vector<128x128xf32> -> vector<128x128xf32>
    %cst_16 = arith.constant 0.000000e+00 : f32
    %38 = vector.broadcast %cst_16 : f32 to vector<128x128xf32>
    %39 = arith.cmpf ogt, %37, %38 : vector<128x128xf32>
    %40 = math.exp %37 : vector<128x128xf32>
    %cst_17 = arith.constant 1.000000e+00 : f32
    %41 = vector.broadcast %cst_17 : f32 to vector<128x128xf32>
    %42 = arith.subf %40, %41 : vector<128x128xf32>
    %43 = arith.select %39, %37, %42 : vector<128x128xi1>, vector<128x128xf32>
    %c0_18 = arith.constant 0 : index
    %c0_19 = arith.constant 0 : index
    %44 = vector.load %arg6[%c0_18, %c0_19] : memref<128x128xf32, #tpu.memory_space<vmem>>, vector<128x128xf32>
    tpu.vector_store %arg6[%c0_18, %c0_19], %43 {strides = array<i32>} : memref<128x128xf32, #tpu.memory_space<vmem>>, vector<128x128xf32>,
    return
  }
  func.func @transform_0(%arg0: i32) -> (i32, i32) {
    %c0_i32 = arith.constant 0 : i32
    %c0_i32_0 = arith.constant 0 : i32
    %c0_i32_1 = arith.constant 0 : i32
    return %c0_i32, %c0_i32_0 : i32, i32
  }
  func.func @transform_1(%arg0: i32) -> (i32, i32) {
    %c0_i32 = arith.constant 0 : i32
    %c0_i32_0 = arith.constant 0 : i32
    %c0_i32_1 = arith.constant 0 : i32
    return %c0_i32, %c0_i32_0 : i32, i32
  }
  func.func @transform_2(%arg0: i32) -> (i32, i32) {
    %c0_i32 = arith.constant 0 : i32
    %c0_i32_0 = arith.constant 0 : i32
    %c0_i32_1 = arith.constant 0 : i32
    return %c0_i32, %c0_i32_0 : i32, i32
  }
  func.func @transform_3(%arg0: i32) -> (i32, i32) {
    %c0_i32 = arith.constant 0 : i32
    %c0_i32_0 = arith.constant 0 : i32
    %c0_i32_1 = arith.constant 0 : i32
    return %c0_i32, %c0_i32_0 : i32, i32
  }
  func.func @transform_4(%arg0: i32) -> (i32, i32) {
    %c0_i32 = arith.constant 0 : i32
    %c0_i32_0 = arith.constant 0 : i32
    return %arg0, %c0_i32 : i32, i32
  }
  func.func @transform_5(%arg0: i32) -> (i32, i32) {
    %c0_i32 = arith.constant 0 : i32
    %c0_i32_0 = arith.constant 0 : i32
    return %arg0, %c0_i32 : i32, i32
  }
  func.func @transform_6(%arg0: i32) -> (i32, i32) {
    %c0_i32 = arith.constant 0 : i32
    %c0_i32_0 = arith.constant 0 : i32
    return %arg0, %c0_i32 : i32, i32
  }
}

</mosaic_0001>

<llo_original>
// kernel: tpu_custom_call.1
$region0: #{tpu_custom_call.1}
  #allocation0 [shape = 'u32[]', space=smem, size = 0x4, offset = 0x4, fixed_abs, tag = 'smem constant byte address 0x4 - core index']
  #allocation1 [shape = 'u32[72,128]{1,0:T(1,128)}', space=vmem, size = 0x9000, scoped, tag = 'internal scratch']
  #allocation2 [shape = 'f32[128,128]{1,0:T(8,128)}', space=vmem, size = 0x10000, scoped, tag = 'scratch operand']
  #allocation3 [shape = 'f32[128,1]{1,0:T(8,128)}', space=vmem, size = 0x10000, scoped, tag = 'scratch operand']
  #allocation4 [shape = 'f32[8,128]{1,0:T(8,128)}', space=vmem, size = 0x1000, scoped, tag = 'scratch operand']
  %s0 = inlined_call_operand.hbm [shape: f32[128,128], index: 0, kind: input, shape index: {}]
  %s1 = inlined_call_operand.hbm [shape: f32[128,128], index: 1, kind: input, shape index: {}]
  %s2 = inlined_call_operand.hbm [shape: f32[8,128], index: 2, kind: input, shape index: {}]
  %s3 = inlined_call_operand.hbm [shape: f32[8,128], index: 3, kind: input, shape index: {}]
  %s4 = inlined_call_operand.hbm [shape: s32[128,128], index: 4, kind: input, shape index: {}]
  %s5 = inlined_call_operand.hbm [shape: f32[128,128], index: 5, kind: output, shape index: {0}]
  %s6 = inlined_call_operand.hbm [shape: f32[128,128], index: 6, kind: output, shape index: {1}]
  %7 = xla_tuple %s5, %s6
  %s8 = sld [smem:[#allocation0]]
  $region62: #{tpu_custom_call.1} parent=0
    _
  %s10 = ssub.s32 1, %s8
  %s11 = scalar_select 0, %s10, %s8
  $region1: #{tpu_custom_call.1} parent=0
    #allocation5 [shape = 'u8[65536]{0}', space=vmem, size = 0x10000, scoped, tag = 'input window, operand 0, single buffered']
    #allocation6 [shape = 's32[1]{0}', space=sflag, size = 0x4, scoped, tag = 'scoped memory for tpu_custom_call.1']
    #allocation7 [shape = 's32[1]{0}', space=sflag, size = 0x4, scoped, tag = 'scoped memory for tpu_custom_call.1']
    #allocation8 [shape = 'u8[65536]{0}', space=vmem, size = 0x10000, scoped, tag = 'input window, operand 1, single buffered']
    #allocation9 [shape = 's32[1]{0}', space=sflag, size = 0x4, scoped, tag = 'scoped memory for tpu_custom_call.1']
    #allocation10 [shape = 'u8[4096]{0}', space=vmem, size = 0x1000, scoped, tag = 'input window, operand 2, single buffered']
    #allocation11 [shape = 'u8[4096]{0}', space=vmem, size = 0x1000, scoped, tag = 'input window, operand 3, single buffered']
    #allocation12 [shape = 's32[1]{0}', space=sflag, size = 0x4, scoped, tag = 'scoped memory for tpu_custom_call.1']
    #allocation13 [shape = 'u8[65536]{0}', space=vmem, size = 0x10000, scoped, tag = 'input window, operand 4, single buffered']
    #allocation14 [shape = 'u8[65536]{0}', space=vmem, size = 0x10000, scoped, tag = 'output window, operand 0, single buffered']
    #allocation15 [shape = 'u8[65536]{0}', space=vmem, size = 0x10000, scoped, tag = 'output window, operand 1, single buffered']
    #allocation16 [shape = 's32[1]{0}', space=sflag, size = 0x4, scoped, tag = 'scoped memory for tpu_custom_call.1']
    %12 = vsyncpa [#allocation6], 0
    %13 = vsyncpa [#allocation9], 0
    %14 = vsyncpa [#allocation12], 0
    %15 = vsyncpa [#allocation7], 0
    %16 = vsyncpa [#allocation16], 0
    // Predicated region
    $region2: #{tpu_custom_call.1} parent=1 // pred_check
      _
    $region3: #{tpu_custom_call.1} parent=1 // pred_check_branch
      %18 = sbr.rel (0) target = $region5
    $region4: #{tpu_custom_call.1} parent=1 // pred_region
      %20 = vsyncadd [#allocation6], 0
      %s21 = sshll.u32 %s0, 4
      %s22 = int_to_ptr.hbm [resolvable:$true] %s21
      %s23 = sshll.u32 [#allocation5], 4
      %s24 = int_to_ptr.vmem [resolvable:$true] %s23
      %29 = dma.hbm_to_vmem [thread:$0]  %s22, 2048, %s24, [#allocation6], 128, 128, 8
    $region5: #{tpu_custom_call.1} parent=1 // pred_fallthru
      _
    // Predicated region
    $region6: #{tpu_custom_call.1} parent=1 // pred_check
      _
    $region7: #{tpu_custom_call.1} parent=1 // pred_check_branch
      %31 = sbr.rel (0) target = $region9
    $region8: #{tpu_custom_call.1} parent=1 // pred_region
      %33 = vsyncadd [#allocation9], 0
      %s34 = sshll.u32 %s1, 4
      %s35 = int_to_ptr.hbm [resolvable:$true] %s34
      %s36 = sshll.u32 [#allocation8], 4
      %s37 = int_to_ptr.vmem [resolvable:$true] %s36
      %42 = dma.hbm_to_vmem [thread:$0]  %s35, 2048, %s37, [#allocation9], 128, 128, 8
    $region9: #{tpu_custom_call.1} parent=1 // pred_fallthru
      _
    // Predicated region
    $region10: #{tpu_custom_call.1} parent=1 // pred_check
      _
    $region11: #{tpu_custom_call.1} parent=1 // pred_check_branch
      %44 = sbr.rel (0) target = $region13
    $region12: #{tpu_custom_call.1} parent=1 // pred_region
      %46 = vsyncadd [#allocation9], 0
      %s48 = sshll.u32 %s2, 4
      %s49 = int_to_ptr.hbm [resolvable:$true] %s48
      %s50 = sshll.u32 [#allocation10], 4
      %s51 = int_to_ptr.vmem [resolvable:$true] %s50
      %53 = dma.hbm_to_vmem [thread:$0]  %s49, 128, %s51, [#allocation9]
    $region13: #{tpu_custom_call.1} parent=1 // pred_fallthru
      _
    // Predicated region
    $region14: #{tpu_custom_call.1} parent=1 // pred_check
      _
    $region15: #{tpu_custom_call.1} parent=1 // pred_check_branch
      %55 = sbr.rel (0) target = $region17
    $region16: #{tpu_custom_call.1} parent=1 // pred_region
      %57 = vsyncadd [#allocation12], 0
      %s59 = sshll.u32 %s3, 4
      %s60 = int_to_ptr.hbm [resolvable:$true] %s59
      %s61 = sshll.u32 [#allocation11], 4
      %s62 = int_to_ptr.vmem [resolvable:$true] %s61
      %64 = dma.hbm_to_vmem [thread:$0]  %s60, 128, %s62, [#allocation12]
    $region17: #{tpu_custom_call.1} parent=1 // pred_fallthru
      _
    // Predicated region
    $region18: #{tpu_custom_call.1} parent=1 // pred_check
      _
    $region19: #{tpu_custom_call.1} parent=1 // pred_check_branch
      %66 = sbr.rel (0) target = $region21
    $region20: #{tpu_custom_call.1} parent=1 // pred_region
      %68 = vsyncadd [#allocation12], 0
      %s69 = sshll.u32 %s4, 4
      %s70 = int_to_ptr.hbm [resolvable:$true] %s69
      %s71 = sshll.u32 [#allocation13], 4
      %s72 = int_to_ptr.vmem [resolvable:$true] %s71
      %77 = dma.hbm_to_vmem [thread:$0]  %s70, 2048, %s72, [#allocation12], 128, 128, 8
    $region21: #{tpu_custom_call.1} parent=1 // pred_fallthru
      _
    // Predicated region
    $region22: #{tpu_custom_call.1} parent=1 // pred_check
      _
    $region23: #{tpu_custom_call.1} parent=1 // pred_check_branch
      %79 = sbr.rel (0) target = $region25
    $region24: #{tpu_custom_call.1} parent=1 // pred_region
      %81 = dma.done [#allocation6], 2048
    $region25: #{tpu_custom_call.1} parent=1 // pred_fallthru
      _
    // Predicated region
    $region26: #{tpu_custom_call.1} parent=1 // pred_check
      _
    $region27: #{tpu_custom_call.1} parent=1 // pred_check_branch
      %83 = sbr.rel (0) target = $region29
    $region28: #{tpu_custom_call.1} parent=1 // pred_region
      %85 = dma.done [#allocation9], 2048
    $region29: #{tpu_custom_call.1} parent=1 // pred_fallthru
      _
    // Predicated region
    $region30: #{tpu_custom_call.1} parent=1 // pred_check
      _
    $region31: #{tpu_custom_call.1} parent=1 // pred_check_branch
      %87 = sbr.rel (0) target = $region33
    $region32: #{tpu_custom_call.1} parent=1 // pred_region
      %89 = dma.done [#allocation9], 128
    $region33: #{tpu_custom_call.1} parent=1 // pred_fallthru
      _
    // Predicated region
    $region34: #{tpu_custom_call.1} parent=1 // pred_check
      _
    $region35: #{tpu_custom_call.1} parent=1 // pred_check_branch
      %91 = sbr.rel (0) target = $region37
    $region36: #{tpu_custom_call.1} parent=1 // pred_region
      %93 = dma.done [#allocation12], 128
    $region37: #{tpu_custom_call.1} parent=1 // pred_fallthru
      _
    // Predicated region
    $region38: #{tpu_custom_call.1} parent=1 // pred_check
      _
    $region39: #{tpu_custom_call.1} parent=1 // pred_check_branch
      %95 = sbr.rel (0) target = $region41
    $region40: #{tpu_custom_call.1} parent=1 // pred_region
      %97 = dma.done [#allocation12], 2048
    $region41: #{tpu_custom_call.1} parent=1 // pred_fallthru
      _
    %p98 = scmp.eq.s32.totalorder 0, 0
    // Predicated region
    $region42: #{tpu_custom_call.1} parent=1 // pred_check
      %p99 = pneg %p98
    $region43: #{tpu_custom_call.1} parent=1 // pred_check_branch
      %101 = sbr.rel (%p99) target = $region45
    $region44: #{tpu_custom_call.1} parent=1 // pred_region
      %v102 = vld [vmem:[#allocation5] sm:$0xff]
      %v103 = vld [vmem:[#allocation5 + $0x8] sm:$0xff]
      %v104 = vld [vmem:[#allocation5 + $0x10] sm:$0xff]
      %v105 = vld [vmem:[#allocation5 + $0x18] sm:$0xff]
      %v106 = vld [vmem:[#allocation5 + $0x20] sm:$0xff]
      %v107 = vld [vmem:[#allocation5 + $0x28] sm:$0xff]
      %v108 = vld [vmem:[#allocation5 + $0x30] sm:$0xff]
      %v109 = vld [vmem:[#allocation5 + $0x38] sm:$0xff]
      %v110 = vld [vmem:[#allocation5 + $0x40] sm:$0xff]
      %v111 = vld [vmem:[#allocation5 + $0x48] sm:$0xff]
      %v112 = vld [vmem:[#allocation5 + $0x50] sm:$0xff]
      %v113 = vld [vmem:[#allocation5 + $0x58] sm:$0xff]
      %v114 = vld [vmem:[#allocation5 + $0x60] sm:$0xff]
      %v115 = vld [vmem:[#allocation5 + $0x68] sm:$0xff]
      %v116 = vld [vmem:[#allocation5 + $0x70] sm:$0xff]
      %v117 = vld [vmem:[#allocation5 + $0x78] sm:$0xff]
      %v118 = vld [vmem:[#allocation8] sm:$0xff]
      %v119 = vld [vmem:[#allocation8 + $0x8] sm:$0xff]
      %v120 = vld [vmem:[#allocation8 + $0x10] sm:$0xff]
      %v121 = vld [vmem:[#allocation8 + $0x18] sm:$0xff]
      %v122 = vld [vmem:[#allocation8 + $0x20] sm:$0xff]
      %v123 = vld [vmem:[#allocation8 + $0x28] sm:$0xff]
      %v124 = vld [vmem:[#allocation8 + $0x30] sm:$0xff]
      %v125 = vld [vmem:[#allocation8 + $0x38] sm:$0xff]
      %v126 = vld [vmem:[#allocation8 + $0x40] sm:$0xff]
      %v127 = vld [vmem:[#allocation8 + $0x48] sm:$0xff]
      %v128 = vld [vmem:[#allocation8 + $0x50] sm:$0xff]
      %v129 = vld [vmem:[#allocation8 + $0x58] sm:$0xff]
      %v130 = vld [vmem:[#allocation8 + $0x60] sm:$0xff]
      %v131 = vld [vmem:[#allocation8 + $0x68] sm:$0xff]
      %v132 = vld [vmem:[#allocation8 + $0x70] sm:$0xff]
      %v133 = vld [vmem:[#allocation8 + $0x78] sm:$0xff]
      %134 = vmatpush.msra.mxu0 %v133
      %135 = vmatpush.msra.mxu0 %v132
      %136 = vmatpush.msra.mxu0 %v131
      %137 = vmatpush.msra.mxu0 %v130
      %138 = vmatpush.msra.mxu0 %v129
      %139 = vmatpush.msra.mxu0 %v128
      %140 = vmatpush.msra.mxu0 %v127
      %141 = vmatpush.msra.mxu0 %v126
      %142 = vmatpush.msra.mxu0 %v125
      %143 = vmatpush.msra.mxu0 %v124
      %144 = vmatpush.msra.mxu0 %v123
      %145 = vmatpush.msra.mxu0 %v122
      %146 = vmatpush.msra.mxu0 %v121
      %147 = vmatpush.msra.mxu0 %v120
      %148 = vmatpush.msra.mxu0 %v119
      %149 = vmatpush.msra.mxu0 %v118
      %150 = vmatmul.f32.gmra.mxu0 %v102
      %v151 = vpop.f32.mrf.mxu0
      %v152 = vadd.f32 0.0, %v151
      %153 = vmatmul.f32.gmra.mxu0 %v103
      %v154 = vpop.f32.mrf.mxu0
      %v155 = vadd.f32 0.0, %v154
      %156 = vmatmul.f32.gmra.mxu0 %v104
      %v157 = vpop.f32.mrf.mxu0
      %v158 = vadd.f32 0.0, %v157
      %159 = vmatmul.f32.gmra.mxu0 %v105
      %v160 = vpop.f32.mrf.mxu0
      %v161 = vadd.f32 0.0, %v160
      %162 = vmatmul.f32.gmra.mxu0 %v106
      %v163 = vpop.f32.mrf.mxu0
      %v164 = vadd.f32 0.0, %v163
      %165 = vmatmul.f32.gmra.mxu0 %v107
      %v166 = vpop.f32.mrf.mxu0
      %v167 = vadd.f32 0.0, %v166
      %168 = vmatmul.f32.gmra.mxu0 %v108
      %v169 = vpop.f32.mrf.mxu0
      %v170 = vadd.f32 0.0, %v169
      %171 = vmatmul.f32.gmra.mxu0 %v109
      %v172 = vpop.f32.mrf.mxu0
      %v173 = vadd.f32 0.0, %v172
      %174 = vmatmul.f32.gmra.mxu0 %v110
      %v175 = vpop.f32.mrf.mxu0
      %v176 = vadd.f32 0.0, %v175
      %177 = vmatmul.f32.gmra.mxu0 %v111
      %v178 = vpop.f32.mrf.mxu0
      %v179 = vadd.f32 0.0, %v178
      %180 = vmatmul.f32.gmra.mxu0 %v112
      %v181 = vpop.f32.mrf.mxu0
      %v182 = vadd.f32 0.0, %v181
      %183 = vmatmul.f32.gmra.mxu0 %v113
      %v184 = vpop.f32.mrf.mxu0
      %v185 = vadd.f32 0.0, %v184
      %186 = vmatmul.f32.gmra.mxu0 %v114
      %v187 = vpop.f32.mrf.mxu0
      %v188 = vadd.f32 0.0, %v187
      %189 = vmatmul.f32.gmra.mxu0 %v115
      %v190 = vpop.f32.mrf.mxu0
      %v191 = vadd.f32 0.0, %v190
      %192 = vmatmul.f32.gmra.mxu0 %v116
      %v193 = vpop.f32.mrf.mxu0
      %v194 = vadd.f32 0.0, %v193
      %195 = vmatmul.f32.gmra.mxu0 %v117
      %v196 = vpop.f32.mrf.mxu0
      %v197 = vadd.f32 0.0, %v196
      %198 = vdwg.mxu0
      %199 = vst [vmem:[#allocation2] sm:$0xff] %v152
      %200 = vst [vmem:[#allocation2 + $0x8] sm:$0xff] %v155
      %201 = vst [vmem:[#allocation2 + $0x10] sm:$0xff] %v158
      %202 = vst [vmem:[#allocation2 + $0x18] sm:$0xff] %v161
      %203 = vst [vmem:[#allocation2 + $0x20] sm:$0xff] %v164
      %204 = vst [vmem:[#allocation2 + $0x28] sm:$0xff] %v167
      %205 = vst [vmem:[#allocation2 + $0x30] sm:$0xff] %v170
      %206 = vst [vmem:[#allocation2 + $0x38] sm:$0xff] %v173
      %207 = vst [vmem:[#allocation2 + $0x40] sm:$0xff] %v176
      %208 = vst [vmem:[#allocation2 + $0x48] sm:$0xff] %v179
      %209 = vst [vmem:[#allocation2 + $0x50] sm:$0xff] %v182
      %210 = vst [vmem:[#allocation2 + $0x58] sm:$0xff] %v185
      %211 = vst [vmem:[#allocation2 + $0x60] sm:$0xff] %v188
      %212 = vst [vmem:[#allocation2 + $0x68] sm:$0xff] %v191
      %213 = vst [vmem:[#allocation2 + $0x70] sm:$0xff] %v194
      %214 = vst [vmem:[#allocation2 + $0x78] sm:$0xff] %v197
      %v215 = vld [vmem:[#allocation10] sm:$0x1]
      %v216 = vperm.slane %v215, 0
      %v217 = vmul.f32 %v152, %v216
      %v218 = vmul.f32 %v155, %v216
      %v219 = vmul.f32 %v158, %v216
      %v220 = vmul.f32 %v161, %v216
      %v221 = vmul.f32 %v164, %v216
      %v222 = vmul.f32 %v167, %v216
      %v223 = vmul.f32 %v170, %v216
      %v224 = vmul.f32 %v173, %v216
      %v225 = vmul.f32 %v176, %v216
      %v226 = vmul.f32 %v179, %v216
      %v227 = vmul.f32 %v182, %v216
      %v228 = vmul.f32 %v185, %v216
      %v229 = vmul.f32 %v188, %v216
      %v230 = vmul.f32 %v191, %v216
      %v231 = vmul.f32 %v194, %v216
      %v232 = vmul.f32 %v197, %v216
      %233 = vadd.xlane.f32.xlu0 %v217
      %v234 = vpop.xlane.xlu0 %233
      %235 = vadd.xlane.f32.xlu0 %v218
      %v236 = vpop.xlane.xlu0 %235
      %237 = vadd.xlane.f32.xlu0 %v219
      %v238 = vpop.xlane.xlu0 %237
      %239 = vadd.xlane.f32.xlu0 %v220
      %v240 = vpop.xlane.xlu0 %239
      %241 = vadd.xlane.f32.xlu0 %v221
      %v242 = vpop.xlane.xlu0 %241
      %243 = vadd.xlane.f32.xlu0 %v222
      %v244 = vpop.xlane.xlu0 %243
      %245 = vadd.xlane.f32.xlu0 %v223
      %v246 = vpop.xlane.xlu0 %245
      %247 = vadd.xlane.f32.xlu0 %v224
      %v248 = vpop.xlane.xlu0 %247
      %249 = vadd.xlane.f32.xlu0 %v225
      %v250 = vpop.xlane.xlu0 %249
      %251 = vadd.xlane.f32.xlu0 %v226
      %v252 = vpop.xlane.xlu0 %251
      %253 = vadd.xlane.f32.xlu0 %v227
      %v254 = vpop.xlane.xlu0 %253
      %255 = vadd.xlane.f32.xlu0 %v228
      %v256 = vpop.xlane.xlu0 %255
      %257 = vadd.xlane.f32.xlu0 %v229
      %v258 = vpop.xlane.xlu0 %257
      %259 = vadd.xlane.f32.xlu0 %v230
      %v260 = vpop.xlane.xlu0 %259
      %261 = vadd.xlane.f32.xlu0 %v231
      %v262 = vpop.xlane.xlu0 %261
      %263 = vadd.xlane.f32.xlu0 %v232
      %v264 = vpop.xlane.xlu0 %263
      %vm265 = vcmask 7168
      %266 = vst.msk [vmem:[#allocation3] sm:$0xff] %vm265, %v234
      %267 = vst.msk [vmem:[#allocation3 + $0x8] sm:$0xff] %vm265, %v236
      %268 = vst.msk [vmem:[#allocation3 + $0x10] sm:$0xff] %vm265, %v238
      %269 = vst.msk [vmem:[#allocation3 + $0x18] sm:$0xff] %vm265, %v240
      %270 = vst.msk [vmem:[#allocation3 + $0x20] sm:$0xff] %vm265, %v242
      %271 = vst.msk [vmem:[#allocation3 + $0x28] sm:$0xff] %vm265, %v244
      %272 = vst.msk [vmem:[#allocation3 + $0x30] sm:$0xff] %vm265, %v246
      %273 = vst.msk [vmem:[#allocation3 + $0x38] sm:$0xff] %vm265, %v248
      %274 = vst.msk [vmem:[#allocation3 + $0x40] sm:$0xff] %vm265, %v250
      %275 = vst.msk [vmem:[#allocation3 + $0x48] sm:$0xff] %vm265, %v252
      %276 = vst.msk [vmem:[#allocation3 + $0x50] sm:$0xff] %vm265, %v254
      %277 = vst.msk [vmem:[#allocation3 + $0x58] sm:$0xff] %vm265, %v256
      %278 = vst.msk [vmem:[#allocation3 + $0x60] sm:$0xff] %vm265, %v258
      %279 = vst.msk [vmem:[#allocation3 + $0x68] sm:$0xff] %vm265, %v260
      %280 = vst.msk [vmem:[#allocation3 + $0x70] sm:$0xff] %vm265, %v262
      %281 = vst.msk [vmem:[#allocation3 + $0x78] sm:$0xff] %vm265, %v264
      %v282 = vld [vmem:[#allocation11] sm:$0xff]
      %283 = vmatpush.xpose.msra.mxu0 %v197
      %284 = vmatpush.xpose.msra.mxu0 %v194
      %285 = vmatpush.xpose.msra.mxu0 %v191
      %286 = vmatpush.xpose.msra.mxu0 %v188
      %287 = vmatpush.xpose.msra.mxu0 %v185
      %288 = vmatpush.xpose.msra.mxu0 %v182
      %289 = vmatpush.xpose.msra.mxu0 %v179
      %290 = vmatpush.xpose.msra.mxu0 %v176
      %291 = vmatpush.xpose.msra.mxu0 %v173
      %292 = vmatpush.xpose.msra.mxu0 %v170
      %293 = vmatpush.xpose.msra.mxu0 %v167
      %294 = vmatpush.xpose.msra.mxu0 %v164
      %295 = vmatpush.xpose.msra.mxu0 %v161
      %296 = vmatpush.xpose.msra.mxu0 %v158
      %297 = vmatpush.xpose.msra.mxu0 %v155
      %298 = vmatpush.xpose.msra.mxu0 %v152
      %299 = vmatmul.f32.gmra.mxu0 %v282
      %v300 = vpop.f32.mrf.mxu0
      %v301 = vadd.f32 0.0, %v300
      %302 = vdwg.mxu0
      %303 = vst [vmem:[#allocation4] sm:$0xff] %v301
    $region45: #{tpu_custom_call.1} parent=1 // pred_fallthru
      _
    %s304 = smul.u32 0, 128
    %s305 = scalar_lea.vmem [#allocation3], %s304
    %v306 = vld [vmem:[%s305] sm:$0xff]
    %v307 = vld [vmem:[%s305 + $0x8] sm:$0xff]
    %v308 = vld [vmem:[%s305 + $0x10] sm:$0xff]
    %v309 = vld [vmem:[%s305 + $0x18] sm:$0xff]
    %v310 = vld [vmem:[%s305 + $0x20] sm:$0xff]
    %v311 = vld [vmem:[%s305 + $0x28] sm:$0xff]
    %v312 = vld [vmem:[%s305 + $0x30] sm:$0xff]
    %v313 = vld [vmem:[%s305 + $0x38] sm:$0xff]
    %v314 = vld [vmem:[%s305 + $0x40] sm:$0xff]
    %v315 = vld [vmem:[%s305 + $0x48] sm:$0xff]
    %v316 = vld [vmem:[%s305 + $0x50] sm:$0xff]
    %v317 = vld [vmem:[%s305 + $0x58] sm:$0xff]
    %v318 = vld [vmem:[%s305 + $0x60] sm:$0xff]
    %v319 = vld [vmem:[%s305 + $0x68] sm:$0xff]
    %v320 = vld [vmem:[%s305 + $0x70] sm:$0xff]
    %v321 = vld [vmem:[%s305 + $0x78] sm:$0xff]
    %v322 = vld [vmem:[#allocation4] sm:$0x1]
    %324 = vset.pattern.permute.xlu0 0
    %325 = vperm.xlu0 %324, %v306
    %v326 = vpop.permute.xlu0 %325
    %329 = vset.pattern.permute.xlu0 0
    %330 = vperm.xlu0 %329, %v307
    %v331 = vpop.permute.xlu0 %330
    %334 = vset.pattern.permute.xlu0 0
    %335 = vperm.xlu0 %334, %v308
    %v336 = vpop.permute.xlu0 %335
    %339 = vset.pattern.permute.xlu0 0
    %340 = vperm.xlu0 %339, %v309
    %v341 = vpop.permute.xlu0 %340
    %344 = vset.pattern.permute.xlu0 0
    %345 = vperm.xlu0 %344, %v310
    %v346 = vpop.permute.xlu0 %345
    %349 = vset.pattern.permute.xlu0 0
    %350 = vperm.xlu0 %349, %v311
    %v351 = vpop.permute.xlu0 %350
    %354 = vset.pattern.permute.xlu0 0
    %355 = vperm.xlu0 %354, %v312
    %v356 = vpop.permute.xlu0 %355
    %359 = vset.pattern.permute.xlu0 0
    %360 = vperm.xlu0 %359, %v313
    %v361 = vpop.permute.xlu0 %360
    %364 = vset.pattern.permute.xlu0 0
    %365 = vperm.xlu0 %364, %v314
    %v366 = vpop.permute.xlu0 %365
    %369 = vset.pattern.permute.xlu0 0
    %370 = vperm.xlu0 %369, %v315
    %v371 = vpop.permute.xlu0 %370
    %374 = vset.pattern.permute.xlu0 0
    %375 = vperm.xlu0 %374, %v316
    %v376 = vpop.permute.xlu0 %375
    %379 = vset.pattern.permute.xlu0 0
    %380 = vperm.xlu0 %379, %v317
    %v381 = vpop.permute.xlu0 %380
    %384 = vset.pattern.permute.xlu0 0
    %385 = vperm.xlu0 %384, %v318
    %v386 = vpop.permute.xlu0 %385
    %389 = vset.pattern.permute.xlu0 0
    %390 = vperm.xlu0 %389, %v319
    %v391 = vpop.permute.xlu0 %390
    %394 = vset.pattern.permute.xlu0 0
    %395 = vperm.xlu0 %394, %v320
    %v396 = vpop.permute.xlu0 %395
    %399 = vset.pattern.permute.xlu0 0
    %400 = vperm.xlu0 %399, %v321
    %v401 = vpop.permute.xlu0 %400
    %v403 = vperm.slane %v322, 0
    %v404 = vadd.f32 %v326, %v403
    %v405 = vadd.f32 %v331, %v403
    %v406 = vadd.f32 %v336, %v403
    %v407 = vadd.f32 %v341, %v403
    %v408 = vadd.f32 %v346, %v403
    %v409 = vadd.f32 %v351, %v403
    %v410 = vadd.f32 %v356, %v403
    %v411 = vadd.f32 %v361, %v403
    %v412 = vadd.f32 %v366, %v403
    %v413 = vadd.f32 %v371, %v403
    %v414 = vadd.f32 %v376, %v403
    %v415 = vadd.f32 %v381, %v403
    %v416 = vadd.f32 %v386, %v403
    %v417 = vadd.f32 %v391, %v403
    %v418 = vadd.f32 %v396, %v403
    %v419 = vadd.f32 %v401, %v403
    %vm420 = vcmp.gt.f32.partialorder %v404, 0.0
    %vm421 = vcmp.gt.f32.partialorder %v405, 0.0
    %vm422 = vcmp.gt.f32.partialorder %v406, 0.0
    %vm423 = vcmp.gt.f32.partialorder %v407, 0.0
    %vm424 = vcmp.gt.f32.partialorder %v408, 0.0
    %vm425 = vcmp.gt.f32.partialorder %v409, 0.0
    %vm426 = vcmp.gt.f32.partialorder %v410, 0.0
    %vm427 = vcmp.gt.f32.partialorder %v411, 0.0
    %vm428 = vcmp.gt.f32.partialorder %v412, 0.0
    %vm429 = vcmp.gt.f32.partialorder %v413, 0.0
    %vm430 = vcmp.gt.f32.partialorder %v414, 0.0
    %vm431 = vcmp.gt.f32.partialorder %v415, 0.0
    %vm432 = vcmp.gt.f32.partialorder %v416, 0.0
    %vm433 = vcmp.gt.f32.partialorder %v417, 0.0
    %vm434 = vcmp.gt.f32.partialorder %v418, 0.0
    %vm435 = vcmp.gt.f32.partialorder %v419, 0.0
    %v436 = vmul.f32 %v404, 0.2
    %v437 = vmul.f32 %v405, 0.2
    %v438 = vmul.f32 %v406, 0.2
    %v439 = vmul.f32 %v407, 0.2
    %v440 = vmul.f32 %v408, 0.2
    %v441 = vmul.f32 %v409, 0.2
    %v442 = vmul.f32 %v410, 0.2
    %v443 = vmul.f32 %v411, 0.2
    %v444 = vmul.f32 %v412, 0.2
    %v445 = vmul.f32 %v413, 0.2
    %v446 = vmul.f32 %v414, 0.2
    %v447 = vmul.f32 %v415, 0.2
    %v448 = vmul.f32 %v416, 0.2
    %v449 = vmul.f32 %v417, 0.2
    %v450 = vmul.f32 %v418, 0.2
    %v451 = vmul.f32 %v419, 0.2
    %v452 = vsel %vm420, %v404, %v436
    %v453 = vsel %vm421, %v405, %v437
    %v454 = vsel %vm422, %v406, %v438
    %v455 = vsel %vm423, %v407, %v439
    %v456 = vsel %vm424, %v408, %v440
    %v457 = vsel %vm425, %v409, %v441
    %v458 = vsel %vm426, %v410, %v442
    %v459 = vsel %vm427, %v411, %v443
    %v460 = vsel %vm428, %v412, %v444
    %v461 = vsel %vm429, %v413, %v445
    %v462 = vsel %vm430, %v414, %v446
    %v463 = vsel %vm431, %v415, %v447
    %v464 = vsel %vm432, %v416, %v448
    %v465 = vsel %vm433, %v417, %v449
    %v466 = vsel %vm434, %v418, %v450
    %v467 = vsel %vm435, %v419, %v451
    %v468 = vld [vmem:[#allocation13] sm:$0xff]
    %v469 = vld [vmem:[#allocation13 + $0x8] sm:$0xff]
    %v470 = vld [vmem:[#allocation13 + $0x10] sm:$0xff]
    %v471 = vld [vmem:[#allocation13 + $0x18] sm:$0xff]
    %v472 = vld [vmem:[#allocation13 + $0x20] sm:$0xff]
    %v473 = vld [vmem:[#allocation13 + $0x28] sm:$0xff]
    %v474 = vld [vmem:[#allocation13 + $0x30] sm:$0xff]
    %v475 = vld [vmem:[#allocation13 + $0x38] sm:$0xff]
    %v476 = vld [vmem:[#allocation13 + $0x40] sm:$0xff]
    %v477 = vld [vmem:[#allocation13 + $0x48] sm:$0xff]
    %v478 = vld [vmem:[#allocation13 + $0x50] sm:$0xff]
    %v479 = vld [vmem:[#allocation13 + $0x58] sm:$0xff]
    %v480 = vld [vmem:[#allocation13 + $0x60] sm:$0xff]
    %v481 = vld [vmem:[#allocation13 + $0x68] sm:$0xff]
    %v482 = vld [vmem:[#allocation13 + $0x70] sm:$0xff]
    %v483 = vld [vmem:[#allocation13 + $0x78] sm:$0xff]
    %vm484 = vcmp.gt.s32.totalorder %v468, 0
    %vm485 = vcmp.gt.s32.totalorder %v469, 0
    %vm486 = vcmp.gt.s32.totalorder %v470, 0
    %vm487 = vcmp.gt.s32.totalorder %v471, 0
    %vm488 = vcmp.gt.s32.totalorder %v472, 0
    %vm489 = vcmp.gt.s32.totalorder %v473, 0
    %vm490 = vcmp.gt.s32.totalorder %v474, 0
    %vm491 = vcmp.gt.s32.totalorder %v475, 0
    %vm492 = vcmp.gt.s32.totalorder %v476, 0
    %vm493 = vcmp.gt.s32.totalorder %v477, 0
    %vm494 = vcmp.gt.s32.totalorder %v478, 0
    %vm495 = vcmp.gt.s32.totalorder %v479, 0
    %vm496 = vcmp.gt.s32.totalorder %v480, 0
    %vm497 = vcmp.gt.s32.totalorder %v481, 0
    %vm498 = vcmp.gt.s32.totalorder %v482, 0
    %vm499 = vcmp.gt.s32.totalorder %v483, 0
    %v500 = vsel %vm484, %v452, -9e+15
    %v501 = vsel %vm485, %v453, -9e+15
    %v502 = vsel %vm486, %v454, -9e+15
    %v503 = vsel %vm487, %v455, -9e+15
    %v504 = vsel %vm488, %v456, -9e+15
    %v505 = vsel %vm489, %v457, -9e+15
    %v506 = vsel %vm490, %v458, -9e+15
    %v507 = vsel %vm491, %v459, -9e+15
    %v508 = vsel %vm492, %v460, -9e+15
    %v509 = vsel %vm493, %v461, -9e+15
    %v510 = vsel %vm494, %v462, -9e+15
    %v511 = vsel %vm495, %v463, -9e+15
    %v512 = vsel %vm496, %v464, -9e+15
    %v513 = vsel %vm497, %v465, -9e+15
    %v514 = vsel %vm498, %v466, -9e+15
    %v515 = vsel %vm499, %v467, -9e+15
    %v516 = vlaneseq
    %v517 = vand.u32 %v516, 127
    %vm518 = vcmp.lt.s32.totalorder %v517, 66
    %v519 = vsel %vm518, %v500, -1e+30
    %v520 = vsel %vm518, %v501, -1e+30
    %v521 = vsel %vm518, %v502, -1e+30
    %v522 = vsel %vm518, %v503, -1e+30
    %v523 = vsel %vm518, %v504, -1e+30
    %v524 = vsel %vm518, %v505, -1e+30
    %v525 = vsel %vm518, %v506, -1e+30
    %v526 = vsel %vm518, %v507, -1e+30
    %v527 = vsel %vm518, %v508, -1e+30
    %v528 = vsel %vm518, %v509, -1e+30
    %v529 = vsel %vm518, %v510, -1e+30
    %v530 = vsel %vm518, %v511, -1e+30
    %v531 = vsel %vm518, %v512, -1e+30
    %v532 = vsel %vm518, %v513, -1e+30
    %v533 = vsel %vm518, %v514, -1e+30
    %v534 = vsel %vm518, %v515, -1e+30
    %535 = vmax.xlane.f32.xlu0 %v519
    %v536 = vpop.xlane.xlu0 %535
    %537 = vmax.xlane.f32.xlu0 %v520
    %v538 = vpop.xlane.xlu0 %537
    %539 = vmax.xlane.f32.xlu0 %v521
    %v540 = vpop.xlane.xlu0 %539
    %541 = vmax.xlane.f32.xlu0 %v522
    %v542 = vpop.xlane.xlu0 %541
    %543 = vmax.xlane.f32.xlu0 %v523
    %v544 = vpop.xlane.xlu0 %543
    %545 = vmax.xlane.f32.xlu0 %v524
    %v546 = vpop.xlane.xlu0 %545
    %547 = vmax.xlane.f32.xlu0 %v525
    %v548 = vpop.xlane.xlu0 %547
    %549 = vmax.xlane.f32.xlu0 %v526
    %v550 = vpop.xlane.xlu0 %549
    %551 = vmax.xlane.f32.xlu0 %v527
    %v552 = vpop.xlane.xlu0 %551
    %553 = vmax.xlane.f32.xlu0 %v528
    %v554 = vpop.xlane.xlu0 %553
    %555 = vmax.xlane.f32.xlu0 %v529
    %v556 = vpop.xlane.xlu0 %555
    %557 = vmax.xlane.f32.xlu0 %v530
    %v558 = vpop.xlane.xlu0 %557
    %559 = vmax.xlane.f32.xlu0 %v531
    %v560 = vpop.xlane.xlu0 %559
    %561 = vmax.xlane.f32.xlu0 %v532
    %v562 = vpop.xlane.xlu0 %561
    %563 = vmax.xlane.f32.xlu0 %v533
    %v564 = vpop.xlane.xlu0 %563
    %565 = vmax.xlane.f32.xlu0 %v534
    %v566 = vpop.xlane.xlu0 %565
    %v567 = vsub.f32 %v519, %v536
    %v568 = vsub.f32 %v520, %v538
    %v569 = vsub.f32 %v521, %v540
    %v570 = vsub.f32 %v522, %v542
    %v571 = vsub.f32 %v523, %v544
    %v572 = vsub.f32 %v524, %v546
    %v573 = vsub.f32 %v525, %v548
    %v574 = vsub.f32 %v526, %v550
    %v575 = vsub.f32 %v527, %v552
    %v576 = vsub.f32 %v528, %v554
    %v577 = vsub.f32 %v529, %v556
    %v578 = vsub.f32 %v530, %v558
    %v579 = vsub.f32 %v531, %v560
    %v580 = vsub.f32 %v532, %v562
    %v581 = vsub.f32 %v533, %v564
    %v582 = vsub.f32 %v534, %v566
    %v583 = vmul.f32 %v567, 1.442695
    %v584 = vpow.pop %v583
    %v585 = vmul.f32 %v568, 1.442695
    %v586 = vpow.pop %v585
    %v587 = vmul.f32 %v569, 1.442695
    %v588 = vpow.pop %v587
    %v589 = vmul.f32 %v570, 1.442695
    %v590 = vpow.pop %v589
    %v591 = vmul.f32 %v571, 1.442695
    %v592 = vpow.pop %v591
    %v593 = vmul.f32 %v572, 1.442695
    %v594 = vpow.pop %v593
    %v595 = vmul.f32 %v573, 1.442695
    %v596 = vpow.pop %v595
    %v597 = vmul.f32 %v574, 1.442695
    %v598 = vpow.pop %v597
    %v599 = vmul.f32 %v575, 1.442695
    %v600 = vpow.pop %v599
    %v601 = vmul.f32 %v576, 1.442695
    %v602 = vpow.pop %v601
    %v603 = vmul.f32 %v577, 1.442695
    %v604 = vpow.pop %v603
    %v605 = vmul.f32 %v578, 1.442695
    %v606 = vpow.pop %v605
    %v607 = vmul.f32 %v579, 1.442695
    %v608 = vpow.pop %v607
    %v609 = vmul.f32 %v580, 1.442695
    %v610 = vpow.pop %v609
    %v611 = vmul.f32 %v581, 1.442695
    %v612 = vpow.pop %v611
    %v613 = vmul.f32 %v582, 1.442695
    %v614 = vpow.pop %v613
    %615 = vadd.xlane.f32.xlu0 %v584
    %v616 = vpop.xlane.xlu0 %615
    %617 = vadd.xlane.f32.xlu0 %v586
    %v618 = vpop.xlane.xlu0 %617
    %619 = vadd.xlane.f32.xlu0 %v588
    %v620 = vpop.xlane.xlu0 %619
    %621 = vadd.xlane.f32.xlu0 %v590
    %v622 = vpop.xlane.xlu0 %621
    %623 = vadd.xlane.f32.xlu0 %v592
    %v624 = vpop.xlane.xlu0 %623
    %625 = vadd.xlane.f32.xlu0 %v594
    %v626 = vpop.xlane.xlu0 %625
    %627 = vadd.xlane.f32.xlu0 %v596
    %v628 = vpop.xlane.xlu0 %627
    %629 = vadd.xlane.f32.xlu0 %v598
    %v630 = vpop.xlane.xlu0 %629
    %631 = vadd.xlane.f32.xlu0 %v600
    %v632 = vpop.xlane.xlu0 %631
    %633 = vadd.xlane.f32.xlu0 %v602
    %v634 = vpop.xlane.xlu0 %633
    %635 = vadd.xlane.f32.xlu0 %v604
    %v636 = vpop.xlane.xlu0 %635
    %637 = vadd.xlane.f32.xlu0 %v606
    %v638 = vpop.xlane.xlu0 %637
    %639 = vadd.xlane.f32.xlu0 %v608
    %v640 = vpop.xlane.xlu0 %639
    %641 = vadd.xlane.f32.xlu0 %v610
    %v642 = vpop.xlane.xlu0 %641
    %643 = vadd.xlane.f32.xlu0 %v612
    %v644 = vpop.xlane.xlu0 %643
    %645 = vadd.xlane.f32.xlu0 %v614
    %v646 = vpop.xlane.xlu0 %645
    %v647 = vrcp.pop %v616
    %v648 = vmul.f32 %v616, %v647
    %v649 = vsub.f32 1.0, %v648
    %v650 = vmul.f32 %v647, %v649
    %v651 = vadd.f32 %v647, %v650
    %vm652 = vweird.f32 %v616
    %vm653 = vweird.f32 %v647
    %vm654 = vmor %vm652, %vm653
    %v655 = vsel %vm654, %v647, %v651
    %v656 = vand.u32 2147483647, %v616
    %vm657 = vcmp.eq.f32.partialorder %v656, 8.507059e+37
    %v658 = vand.u32 %v616, 2147483648
    %v659 = vor.u32 1.1754944e-38, %v658
    %v660 = vsel %vm657, %v659, %v655
    %v661 = vmul.f32 %v584, %v660
    %v662 = vrcp.pop %v618
    %v663 = vmul.f32 %v618, %v662
    %v664 = vsub.f32 1.0, %v663
    %v665 = vmul.f32 %v662, %v664
    %v666 = vadd.f32 %v662, %v665
    %vm667 = vweird.f32 %v618
    %vm668 = vweird.f32 %v662
    %vm669 = vmor %vm667, %vm668
    %v670 = vsel %vm669, %v662, %v666
    %v671 = vand.u32 2147483647, %v618
    %vm672 = vcmp.eq.f32.partialorder %v671, 8.507059e+37
    %v673 = vand.u32 %v618, 2147483648
    %v674 = vor.u32 1.1754944e-38, %v673
    %v675 = vsel %vm672, %v674, %v670
    %v676 = vmul.f32 %v586, %v675
    %v677 = vrcp.pop %v620
    %v678 = vmul.f32 %v620, %v677
    %v679 = vsub.f32 1.0, %v678
    %v680 = vmul.f32 %v677, %v679
    %v681 = vadd.f32 %v677, %v680
    %vm682 = vweird.f32 %v620
    %vm683 = vweird.f32 %v677
    %vm684 = vmor %vm682, %vm683
    %v685 = vsel %vm684, %v677, %v681
    %v686 = vand.u32 2147483647, %v620
    %vm687 = vcmp.eq.f32.partialorder %v686, 8.507059e+37
    %v688 = vand.u32 %v620, 2147483648
    %v689 = vor.u32 1.1754944e-38, %v688
    %v690 = vsel %vm687, %v689, %v685
    %v691 = vmul.f32 %v588, %v690
    %v692 = vrcp.pop %v622
    %v693 = vmul.f32 %v622, %v692
    %v694 = vsub.f32 1.0, %v693
    %v695 = vmul.f32 %v692, %v694
    %v696 = vadd.f32 %v692, %v695
    %vm697 = vweird.f32 %v622
    %vm698 = vweird.f32 %v692
    %vm699 = vmor %vm697, %vm698
    %v700 = vsel %vm699, %v692, %v696
    %v701 = vand.u32 2147483647, %v622
    %vm702 = vcmp.eq.f32.partialorder %v701, 8.507059e+37
    %v703 = vand.u32 %v622, 2147483648
    %v704 = vor.u32 1.1754944e-38, %v703
    %v705 = vsel %vm702, %v704, %v700
    %v706 = vmul.f32 %v590, %v705
    %v707 = vrcp.pop %v624
    %v708 = vmul.f32 %v624, %v707
    %v709 = vsub.f32 1.0, %v708
    %v710 = vmul.f32 %v707, %v709
    %v711 = vadd.f32 %v707, %v710
    %vm712 = vweird.f32 %v624
    %vm713 = vweird.f32 %v707
    %vm714 = vmor %vm712, %vm713
    %v715 = vsel %vm714, %v707, %v711
    %v716 = vand.u32 2147483647, %v624
    %vm717 = vcmp.eq.f32.partialorder %v716, 8.507059e+37
    %v718 = vand.u32 %v624, 2147483648
    %v719 = vor.u32 1.1754944e-38, %v718
    %v720 = vsel %vm717, %v719, %v715
    %v721 = vmul.f32 %v592, %v720
    %v722 = vrcp.pop %v626
    %v723 = vmul.f32 %v626, %v722
    %v724 = vsub.f32 1.0, %v723
    %v725 = vmul.f32 %v722, %v724
    %v726 = vadd.f32 %v722, %v725
    %vm727 = vweird.f32 %v626
    %vm728 = vweird.f32 %v722
    %vm729 = vmor %vm727, %vm728
    %v730 = vsel %vm729, %v722, %v726
    %v731 = vand.u32 2147483647, %v626
    %vm732 = vcmp.eq.f32.partialorder %v731, 8.507059e+37
    %v733 = vand.u32 %v626, 2147483648
    %v734 = vor.u32 1.1754944e-38, %v733
    %v735 = vsel %vm732, %v734, %v730
    %v736 = vmul.f32 %v594, %v735
    %v737 = vrcp.pop %v628
    %v738 = vmul.f32 %v628, %v737
    %v739 = vsub.f32 1.0, %v738
    %v740 = vmul.f32 %v737, %v739
    %v741 = vadd.f32 %v737, %v740
    %vm742 = vweird.f32 %v628
    %vm743 = vweird.f32 %v737
    %vm744 = vmor %vm742, %vm743
    %v745 = vsel %vm744, %v737, %v741
    %v746 = vand.u32 2147483647, %v628
    %vm747 = vcmp.eq.f32.partialorder %v746, 8.507059e+37
    %v748 = vand.u32 %v628, 2147483648
    %v749 = vor.u32 1.1754944e-38, %v748
    %v750 = vsel %vm747, %v749, %v745
    %v751 = vmul.f32 %v596, %v750
    %v752 = vrcp.pop %v630
    %v753 = vmul.f32 %v630, %v752
    %v754 = vsub.f32 1.0, %v753
    %v755 = vmul.f32 %v752, %v754
    %v756 = vadd.f32 %v752, %v755
    %vm757 = vweird.f32 %v630
    %vm758 = vweird.f32 %v752
    %vm759 = vmor %vm757, %vm758
    %v760 = vsel %vm759, %v752, %v756
    %v761 = vand.u32 2147483647, %v630
    %vm762 = vcmp.eq.f32.partialorder %v761, 8.507059e+37
    %v763 = vand.u32 %v630, 2147483648
    %v764 = vor.u32 1.1754944e-38, %v763
    %v765 = vsel %vm762, %v764, %v760
    %v766 = vmul.f32 %v598, %v765
    %v767 = vrcp.pop %v632
    %v768 = vmul.f32 %v632, %v767
    %v769 = vsub.f32 1.0, %v768
    %v770 = vmul.f32 %v767, %v769
    %v771 = vadd.f32 %v767, %v770
    %vm772 = vweird.f32 %v632
    %vm773 = vweird.f32 %v767
    %vm774 = vmor %vm772, %vm773
    %v775 = vsel %vm774, %v767, %v771
    %v776 = vand.u32 2147483647, %v632
    %vm777 = vcmp.eq.f32.partialorder %v776, 8.507059e+37
    %v778 = vand.u32 %v632, 2147483648
    %v779 = vor.u32 1.1754944e-38, %v778
    %v780 = vsel %vm777, %v779, %v775
    %v781 = vmul.f32 %v600, %v780
    %v782 = vrcp.pop %v634
    %v783 = vmul.f32 %v634, %v782
    %v784 = vsub.f32 1.0, %v783
    %v785 = vmul.f32 %v782, %v784
    %v786 = vadd.f32 %v782, %v785
    %vm787 = vweird.f32 %v634
    %vm788 = vweird.f32 %v782
    %vm789 = vmor %vm787, %vm788
    %v790 = vsel %vm789, %v782, %v786
    %v791 = vand.u32 2147483647, %v634
    %vm792 = vcmp.eq.f32.partialorder %v791, 8.507059e+37
    %v793 = vand.u32 %v634, 2147483648
    %v794 = vor.u32 1.1754944e-38, %v793
    %v795 = vsel %vm792, %v794, %v790
    %v796 = vmul.f32 %v602, %v795
    %v797 = vrcp.pop %v636
    %v798 = vmul.f32 %v636, %v797
    %v799 = vsub.f32 1.0, %v798
    %v800 = vmul.f32 %v797, %v799
    %v801 = vadd.f32 %v797, %v800
    %vm802 = vweird.f32 %v636
    %vm803 = vweird.f32 %v797
    %vm804 = vmor %vm802, %vm803
    %v805 = vsel %vm804, %v797, %v801
    %v806 = vand.u32 2147483647, %v636
    %vm807 = vcmp.eq.f32.partialorder %v806, 8.507059e+37
    %v808 = vand.u32 %v636, 2147483648
    %v809 = vor.u32 1.1754944e-38, %v808
    %v810 = vsel %vm807, %v809, %v805
    %v811 = vmul.f32 %v604, %v810
    %v812 = vrcp.pop %v638
    %v813 = vmul.f32 %v638, %v812
    %v814 = vsub.f32 1.0, %v813
    %v815 = vmul.f32 %v812, %v814
    %v816 = vadd.f32 %v812, %v815
    %vm817 = vweird.f32 %v638
    %vm818 = vweird.f32 %v812
    %vm819 = vmor %vm817, %vm818
    %v820 = vsel %vm819, %v812, %v816
    %v821 = vand.u32 2147483647, %v638
    %vm822 = vcmp.eq.f32.partialorder %v821, 8.507059e+37
    %v823 = vand.u32 %v638, 2147483648
    %v824 = vor.u32 1.1754944e-38, %v823
    %v825 = vsel %vm822, %v824, %v820
    %v826 = vmul.f32 %v606, %v825
    %v827 = vrcp.pop %v640
    %v828 = vmul.f32 %v640, %v827
    %v829 = vsub.f32 1.0, %v828
    %v830 = vmul.f32 %v827, %v829
    %v831 = vadd.f32 %v827, %v830
    %vm832 = vweird.f32 %v640
    %vm833 = vweird.f32 %v827
    %vm834 = vmor %vm832, %vm833
    %v835 = vsel %vm834, %v827, %v831
    %v836 = vand.u32 2147483647, %v640
    %vm837 = vcmp.eq.f32.partialorder %v836, 8.507059e+37
    %v838 = vand.u32 %v640, 2147483648
    %v839 = vor.u32 1.1754944e-38, %v838
    %v840 = vsel %vm837, %v839, %v835
    %v841 = vmul.f32 %v608, %v840
    %v842 = vrcp.pop %v642
    %v843 = vmul.f32 %v642, %v842
    %v844 = vsub.f32 1.0, %v843
    %v845 = vmul.f32 %v842, %v844
    %v846 = vadd.f32 %v842, %v845
    %vm847 = vweird.f32 %v642
    %vm848 = vweird.f32 %v842
    %vm849 = vmor %vm847, %vm848
    %v850 = vsel %vm849, %v842, %v846
    %v851 = vand.u32 2147483647, %v642
    %vm852 = vcmp.eq.f32.partialorder %v851, 8.507059e+37
    %v853 = vand.u32 %v642, 2147483648
    %v854 = vor.u32 1.1754944e-38, %v853
    %v855 = vsel %vm852, %v854, %v850
    %v856 = vmul.f32 %v610, %v855
    %v857 = vrcp.pop %v644
    %v858 = vmul.f32 %v644, %v857
    %v859 = vsub.f32 1.0, %v858
    %v860 = vmul.f32 %v857, %v859
    %v861 = vadd.f32 %v857, %v860
    %vm862 = vweird.f32 %v644
    %vm863 = vweird.f32 %v857
    %vm864 = vmor %vm862, %vm863
    %v865 = vsel %vm864, %v857, %v861
    %v866 = vand.u32 2147483647, %v644
    %vm867 = vcmp.eq.f32.partialorder %v866, 8.507059e+37
    %v868 = vand.u32 %v644, 2147483648
    %v869 = vor.u32 1.1754944e-38, %v868
    %v870 = vsel %vm867, %v869, %v865
    %v871 = vmul.f32 %v612, %v870
    %v872 = vrcp.pop %v646
    %v873 = vmul.f32 %v646, %v872
    %v874 = vsub.f32 1.0, %v873
    %v875 = vmul.f32 %v872, %v874
    %v876 = vadd.f32 %v872, %v875
    %vm877 = vweird.f32 %v646
    %vm878 = vweird.f32 %v872
    %vm879 = vmor %vm877, %vm878
    %v880 = vsel %vm879, %v872, %v876
    %v881 = vand.u32 2147483647, %v646
    %vm882 = vcmp.eq.f32.partialorder %v881, 8.507059e+37
    %v883 = vand.u32 %v646, 2147483648
    %v884 = vor.u32 1.1754944e-38, %v883
    %v885 = vsel %vm882, %v884, %v880
    %v886 = vmul.f32 %v614, %v885
    %887 = vst [vmem:[#allocation15] sm:$0xff] %v661
    %888 = vst [vmem:[#allocation15 + $0x8] sm:$0xff] %v676
    %889 = vst [vmem:[#allocation15 + $0x10] sm:$0xff] %v691
    %890 = vst [vmem:[#allocation15 + $0x18] sm:$0xff] %v706
    %891 = vst [vmem:[#allocation15 + $0x20] sm:$0xff] %v721
    %892 = vst [vmem:[#allocation15 + $0x28] sm:$0xff] %v736
    %893 = vst [vmem:[#allocation15 + $0x30] sm:$0xff] %v751
    %894 = vst [vmem:[#allocation15 + $0x38] sm:$0xff] %v766
    %895 = vst [vmem:[#allocation15 + $0x40] sm:$0xff] %v781
    %896 = vst [vmem:[#allocation15 + $0x48] sm:$0xff] %v796
    %897 = vst [vmem:[#allocation15 + $0x50] sm:$0xff] %v811
    %898 = vst [vmem:[#allocation15 + $0x58] sm:$0xff] %v826
    %899 = vst [vmem:[#allocation15 + $0x60] sm:$0xff] %v841
    %900 = vst [vmem:[#allocation15 + $0x68] sm:$0xff] %v856
    %901 = vst [vmem:[#allocation15 + $0x70] sm:$0xff] %v871
    %902 = vst [vmem:[#allocation15 + $0x78] sm:$0xff] %v886
    %v903 = vld [vmem:[#allocation2] sm:$0xff]
    %v904 = vld [vmem:[#allocation2 + $0x8] sm:$0xff]
    %v905 = vld [vmem:[#allocation2 + $0x10] sm:$0xff]
    %v906 = vld [vmem:[#allocation2 + $0x18] sm:$0xff]
    %v907 = vld [vmem:[#allocation2 + $0x20] sm:$0xff]
    %v908 = vld [vmem:[#allocation2 + $0x28] sm:$0xff]
    %v909 = vld [vmem:[#allocation2 + $0x30] sm:$0xff]
    %v910 = vld [vmem:[#allocation2 + $0x38] sm:$0xff]
    %v911 = vld [vmem:[#allocation2 + $0x40] sm:$0xff]
    %v912 = vld [vmem:[#allocation2 + $0x48] sm:$0xff]
    %v913 = vld [vmem:[#allocation2 + $0x50] sm:$0xff]
    %v914 = vld [vmem:[#allocation2 + $0x58] sm:$0xff]
    %v915 = vld [vmem:[#allocation2 + $0x60] sm:$0xff]
    %v916 = vld [vmem:[#allocation2 + $0x68] sm:$0xff]
    %v917 = vld [vmem:[#allocation2 + $0x70] sm:$0xff]
    %v918 = vld [vmem:[#allocation2 + $0x78] sm:$0xff]
    %919 = vmatpush.msra.mxu0 %v918
    %920 = vmatpush.msra.mxu0 %v917
    %921 = vmatpush.msra.mxu0 %v916
    %922 = vmatpush.msra.mxu0 %v915
    %923 = vmatpush.msra.mxu0 %v914
    %924 = vmatpush.msra.mxu0 %v913
    %925 = vmatpush.msra.mxu0 %v912
    %926 = vmatpush.msra.mxu0 %v911
    %927 = vmatpush.msra.mxu0 %v910
    %928 = vmatpush.msra.mxu0 %v909
    %929 = vmatpush.msra.mxu0 %v908
    %930 = vmatpush.msra.mxu0 %v907
    %931 = vmatpush.msra.mxu0 %v906
    %932 = vmatpush.msra.mxu0 %v905
    %933 = vmatpush.msra.mxu0 %v904
    %934 = vmatpush.msra.mxu0 %v903
    %935 = vmatmul.f32.gmra.mxu0 %v661
    %v936 = vpop.f32.mrf.mxu0
    %v937 = vadd.f32 0.0, %v936
    %938 = vmatmul.f32.gmra.mxu0 %v676
    %v939 = vpop.f32.mrf.mxu0
    %v940 = vadd.f32 0.0, %v939
    %941 = vmatmul.f32.gmra.mxu0 %v691
    %v942 = vpop.f32.mrf.mxu0
    %v943 = vadd.f32 0.0, %v942
    %944 = vmatmul.f32.gmra.mxu0 %v706
    %v945 = vpop.f32.mrf.mxu0
    %v946 = vadd.f32 0.0, %v945
    %947 = vmatmul.f32.gmra.mxu0 %v721
    %v948 = vpop.f32.mrf.mxu0
    %v949 = vadd.f32 0.0, %v948
    %950 = vmatmul.f32.gmra.mxu0 %v736
    %v951 = vpop.f32.mrf.mxu0
    %v952 = vadd.f32 0.0, %v951
    %953 = vmatmul.f32.gmra.mxu0 %v751
    %v954 = vpop.f32.mrf.mxu0
    %v955 = vadd.f32 0.0, %v954
    %956 = vmatmul.f32.gmra.mxu0 %v766
    %v957 = vpop.f32.mrf.mxu0
    %v958 = vadd.f32 0.0, %v957
    %959 = vmatmul.f32.gmra.mxu0 %v781
    %v960 = vpop.f32.mrf.mxu0
    %v961 = vadd.f32 0.0, %v960
    %962 = vmatmul.f32.gmra.mxu0 %v796
    %v963 = vpop.f32.mrf.mxu0
    %v964 = vadd.f32 0.0, %v963
    %965 = vmatmul.f32.gmra.mxu0 %v811
    %v966 = vpop.f32.mrf.mxu0
    %v967 = vadd.f32 0.0, %v966
    %968 = vmatmul.f32.gmra.mxu0 %v826
    %v969 = vpop.f32.mrf.mxu0
    %v970 = vadd.f32 0.0, %v969
    %971 = vmatmul.f32.gmra.mxu0 %v841
    %v972 = vpop.f32.mrf.mxu0
    %v973 = vadd.f32 0.0, %v972
    %974 = vmatmul.f32.gmra.mxu0 %v856
    %v975 = vpop.f32.mrf.mxu0
    %v976 = vadd.f32 0.0, %v975
    %977 = vmatmul.f32.gmra.mxu0 %v871
    %v978 = vpop.f32.mrf.mxu0
    %v979 = vadd.f32 0.0, %v978
    %980 = vmatmul.f32.gmra.mxu0 %v886
    %v981 = vpop.f32.mrf.mxu0
    %v982 = vadd.f32 0.0, %v981
    %983 = vdwg.mxu0
    %vm984 = vcmp.gt.f32.partialorder %v937, 0.0
    %vm985 = vcmp.gt.f32.partialorder %v940, 0.0
    %vm986 = vcmp.gt.f32.partialorder %v943, 0.0
    %vm987 = vcmp.gt.f32.partialorder %v946, 0.0
    %vm988 = vcmp.gt.f32.partialorder %v949, 0.0
    %vm989 = vcmp.gt.f32.partialorder %v952, 0.0
    %vm990 = vcmp.gt.f32.partialorder %v955, 0.0
    %vm991 = vcmp.gt.f32.partialorder %v958, 0.0
    %vm992 = vcmp.gt.f32.partialorder %v961, 0.0
    %vm993 = vcmp.gt.f32.partialorder %v964, 0.0
    %vm994 = vcmp.gt.f32.partialorder %v967, 0.0
    %vm995 = vcmp.gt.f32.partialorder %v970, 0.0
    %vm996 = vcmp.gt.f32.partialorder %v973, 0.0
    %vm997 = vcmp.gt.f32.partialorder %v976, 0.0
    %vm998 = vcmp.gt.f32.partialorder %v979, 0.0
    %vm999 = vcmp.gt.f32.partialorder %v982, 0.0
    %v1000 = vmul.f32 %v937, 1.442695
    %v1001 = vpow.pop %v1000
    %v1002 = vmul.f32 %v940, 1.442695
    %v1003 = vpow.pop %v1002
    %v1004 = vmul.f32 %v943, 1.442695
    %v1005 = vpow.pop %v1004
    %v1006 = vmul.f32 %v946, 1.442695
    %v1007 = vpow.pop %v1006
    %v1008 = vmul.f32 %v949, 1.442695
    %v1009 = vpow.pop %v1008
    %v1010 = vmul.f32 %v952, 1.442695
    %v1011 = vpow.pop %v1010
    %v1012 = vmul.f32 %v955, 1.442695
    %v1013 = vpow.pop %v1012
    %v1014 = vmul.f32 %v958, 1.442695
    %v1015 = vpow.pop %v1014
    %v1016 = vmul.f32 %v961, 1.442695
    %v1017 = vpow.pop %v1016
    %v1018 = vmul.f32 %v964, 1.442695
    %v1019 = vpow.pop %v1018
    %v1020 = vmul.f32 %v967, 1.442695
    %v1021 = vpow.pop %v1020
    %v1022 = vmul.f32 %v970, 1.442695
    %v1023 = vpow.pop %v1022
    %v1024 = vmul.f32 %v973, 1.442695
    %v1025 = vpow.pop %v1024
    %v1026 = vmul.f32 %v976, 1.442695
    %v1027 = vpow.pop %v1026
    %v1028 = vmul.f32 %v979, 1.442695
    %v1029 = vpow.pop %v1028
    %v1030 = vmul.f32 %v982, 1.442695
    %v1031 = vpow.pop %v1030
    %v1032 = vsub.f32 %v1001, 1.0
    %v1033 = vsub.f32 %v1003, 1.0
    %v1034 = vsub.f32 %v1005, 1.0
    %v1035 = vsub.f32 %v1007, 1.0
    %v1036 = vsub.f32 %v1009, 1.0
    %v1037 = vsub.f32 %v1011, 1.0
    %v1038 = vsub.f32 %v1013, 1.0
    %v1039 = vsub.f32 %v1015, 1.0
    %v1040 = vsub.f32 %v1017, 1.0
    %v1041 = vsub.f32 %v1019, 1.0
    %v1042 = vsub.f32 %v1021, 1.0
    %v1043 = vsub.f32 %v1023, 1.0
    %v1044 = vsub.f32 %v1025, 1.0
    %v1045 = vsub.f32 %v1027, 1.0
    %v1046 = vsub.f32 %v1029, 1.0
    %v1047 = vsub.f32 %v1031, 1.0
    %v1048 = vsel %vm984, %v937, %v1032
    %v1049 = vsel %vm985, %v940, %v1033
    %v1050 = vsel %vm986, %v943, %v1034
    %v1051 = vsel %vm987, %v946, %v1035
    %v1052 = vsel %vm988, %v949, %v1036
    %v1053 = vsel %vm989, %v952, %v1037
    %v1054 = vsel %vm990, %v955, %v1038
    %v1055 = vsel %vm991, %v958, %v1039
    %v1056 = vsel %vm992, %v961, %v1040
    %v1057 = vsel %vm993, %v964, %v1041
    %v1058 = vsel %vm994, %v967, %v1042
    %v1059 = vsel %vm995, %v970, %v1043
    %v1060 = vsel %vm996, %v973, %v1044
    %v1061 = vsel %vm997, %v976, %v1045
    %v1062 = vsel %vm998, %v979, %v1046
    %v1063 = vsel %vm999, %v982, %v1047
    %1064 = vst [vmem:[#allocation14] sm:$0xff] %v1048
    %1065 = vst [vmem:[#allocation14 + $0x8] sm:$0xff] %v1049
    %1066 = vst [vmem:[#allocation14 + $0x10] sm:$0xff] %v1050
    %1067 = vst [vmem:[#allocation14 + $0x18] sm:$0xff] %v1051
    %1068 = vst [vmem:[#allocation14 + $0x20] sm:$0xff] %v1052
    %1069 = vst [vmem:[#allocation14 + $0x28] sm:$0xff] %v1053
    %1070 = vst [vmem:[#allocation14 + $0x30] sm:$0xff] %v1054
    %1071 = vst [vmem:[#allocation14 + $0x38] sm:$0xff] %v1055
    %1072 = vst [vmem:[#allocation14 + $0x40] sm:$0xff] %v1056
    %1073 = vst [vmem:[#allocation14 + $0x48] sm:$0xff] %v1057
    %1074 = vst [vmem:[#allocation14 + $0x50] sm:$0xff] %v1058
    %1075 = vst [vmem:[#allocation14 + $0x58] sm:$0xff] %v1059
    %1076 = vst [vmem:[#allocation14 + $0x60] sm:$0xff] %v1060
    %1077 = vst [vmem:[#allocation14 + $0x68] sm:$0xff] %v1061
    %1078 = vst [vmem:[#allocation14 + $0x70] sm:$0xff] %v1062
    %1079 = vst [vmem:[#allocation14 + $0x78] sm:$0xff] %v1063
    // Predicated region
    $region46: #{tpu_custom_call.1} parent=1 // pred_check
      _
    $region47: #{tpu_custom_call.1} parent=1 // pred_check_branch
      %1081 = sbr.rel (0) target = $region49
    $region48: #{tpu_custom_call.1} parent=1 // pred_region
      %1083 = vsyncadd [#allocation7], 0
      %s1084 = sshll.u32 [#allocation14], 4
      %s1085 = int_to_ptr.vmem [resolvable:$true] %s1084
      %s1086 = sshll.u32 %s5, 4
      %s1087 = int_to_ptr.hbm [resolvable:$true] %s1086
      %1092 = dma.vmem_to_hbm [thread:$0]  %s1085, 2048, %s1087, [#allocation7], 128, 128, 8
    $region49: #{tpu_custom_call.1} parent=1 // pred_fallthru
      _
    // Predicated region
    $region50: #{tpu_custom_call.1} parent=1 // pred_check
      _
    $region51: #{tpu_custom_call.1} parent=1 // pred_check_branch
      %1094 = sbr.rel (0) target = $region53
    $region52: #{tpu_custom_call.1} parent=1 // pred_region
      %1096 = vsyncadd [#allocation16], 0
      %s1097 = sshll.u32 [#allocation15], 4
      %s1098 = int_to_ptr.vmem [resolvable:$true] %s1097
      %s1099 = sshll.u32 %s6, 4
      %s1100 = int_to_ptr.hbm [resolvable:$true] %s1099
      %1105 = dma.vmem_to_hbm [thread:$0]  %s1098, 2048, %s1100, [#allocation16], 128, 128, 8
    $region53: #{tpu_custom_call.1} parent=1 // pred_fallthru
      _
    // Predicated region
    $region54: #{tpu_custom_call.1} parent=1 // pred_check
      _
    $region55: #{tpu_custom_call.1} parent=1 // pred_check_branch
      %1107 = sbr.rel (0) target = $region57
    $region56: #{tpu_custom_call.1} parent=1 // pred_region
      %1109 = dma.done [#allocation7], 2048
    $region57: #{tpu_custom_call.1} parent=1 // pred_fallthru
      _
    // Predicated region
    $region58: #{tpu_custom_call.1} parent=1 // pred_check
      _
    $region59: #{tpu_custom_call.1} parent=1 // pred_check_branch
      %1111 = sbr.rel (0) target = $region61
    $region60: #{tpu_custom_call.1} parent=1 // pred_region
      %1113 = dma.done [#allocation16], 2048
    $region61: #{tpu_custom_call.1} parent=1 // pred_fallthru
      _
    %1114 = vsyncpa [#allocation6], 1
    %1115 = vsyncpa [#allocation9], 1
    %1116 = vsyncpa [#allocation12], 1
    %1117 = vsyncpa [#allocation7], 1
    %1118 = vsyncpa [#allocation16], 1

</llo_original>
